<compile_context>
chip_gen: v6e
topology: v6e:2x2x1
jax: 0.10.0
libtpu: 0.0.40
codegen_flags: <defaults>
</compile_context>

<pallas_src>
import jax
import jax.numpy as jnp
from jax.experimental import pallas as pl
from jax.experimental.pallas import tpu as pltpu


def _linreg_kernel(w_ref, b_ref, x_ref, o_ref):
    # w_ref / b_ref live in SMEM as shape (1,) scalars.
    # The hot path is a single fused mul+add on the VPU over the VMEM tile.
    w = w_ref[0]
    b = b_ref[0]
    o_ref[...] = w * x_ref[...] + b


def _round_up(v: int, m: int) -> int:
    return ((v + m - 1) // m) * m


def _choose_tiles(M: int, N: int, itemsize: int,
                  target_block_bytes: int = 8 << 20,
                  max_tile_cols: int = 8192):
    """Pick a large, lane-dense (rows, cols) tile bounded by the VMEM budget.

    Block bytes ~ target_block_bytes; total VMEM ~= 4 * block_bytes
    (input + output, each double-buffered), which must fit the scoped limit.
    """
    # Columns: full (rounded-up) width, capped so very wide inputs still fit.
    tile_cols = min(_round_up(N, 128), max_tile_cols)
    # Rows: fill the remaining block budget, multiple of 8 sublanes.
    rows_budget = max(8, target_block_bytes // (tile_cols * itemsize))
    rows_budget = max(8, (rows_budget // 8) * 8)
    tile_rows = min(_round_up(M, 8), rows_budget)
    return tile_rows, tile_cols


def linear_regression_forward(x: jax.Array, weight: jax.Array, bias: jax.Array
                              ) -> jax.Array:
    """y = weight * x + bias, elementwise, computed inside a Pallas kernel."""
    assert x.ndim == 2, "kernel expects a 2-D (rows, cols) layout"
    M, N = x.shape
    itemsize = jnp.dtype(x.dtype).itemsize

    tile_rows, tile_cols = _choose_tiles(M, N, itemsize)
    grid = (pl.cdiv(M, tile_rows), pl.cdiv(N, tile_cols))

    return pl.pallas_call(
        _linreg_kernel,
        out_shape=jax.ShapeDtypeStruct((M, N), x.dtype),
        grid=grid,
        in_specs=[
            pl.BlockSpec(memory_space=pltpu.SMEM),                    # weight (1,)
            pl.BlockSpec(memory_space=pltpu.SMEM),                    # bias   (1,)
            pl.BlockSpec((tile_rows, tile_cols), lambda i, j: (i, j)),  # x tile
        ],
        out_specs=pl.BlockSpec((tile_rows, tile_cols), lambda i, j: (i, j)),
        compiler_params=pltpu.CompilerParams(
            dimension_semantics=("parallel", "parallel"),
            vmem_limit_bytes=48 << 20,  # room for ~8 MiB blocks, 4x buffered
        ),
    )(weight, bias, x)


if __name__ == "__main__":
    key = jax.random.PRNGKey(0)
    k_w, k_b, k_x, k_x2 = jax.random.split(key, 4)

    # Deterministic parameter init matching nn.Parameter(torch.randn(1)) shapes.
    weight = jax.random.normal(k_w, (1,), dtype=jnp.float32)
    bias = jax.random.normal(k_b, (1,), dtype=jnp.float32)

    # Small, vreg-friendly input consistent with the module's forward.
    x = jax.random.normal(k_x, (16, 128), dtype=jnp.float32)
    y = jax.block_until_ready(linear_regression_forward(x, weight, bias))
    y_ref = weight[0] * x + bias[0]
    assert jnp.allclose(y, y_ref, atol=1e-6), "mismatch vs reference (aligned)"

    # Ragged shape: exercises the cdiv grid / partial last block path.
    x2 = jax.random.normal(k_x2, (50, 200), dtype=jnp.float32)
    y2 = jax.block_until_ready(linear_regression_forward(x2, weight, bias))
    y2_ref = weight[0] * x2 + bias[0]
    assert jnp.allclose(y2, y2_ref, atol=1e-6), "mismatch vs reference (ragged)"

    print("KERNEL_OK")
</pallas_src>

<mosaic_0001>
module attributes {stable_mosaic.version = 11 : i64} {
  func.func @_linreg_kernel(%arg0: i32, %arg1: i32, %arg2: memref<1xf32, #tpu.memory_space<smem>>, %arg3: memref<1xf32, #tpu.memory_space<smem>>, %arg4: memref<16x128xf32, #tpu.memory_space<vmem>>, %arg5: memref<16x128xf32, #tpu.memory_space<vmem>>) attributes {dimension_semantics = [#tpu.dimension_semantics<parallel>, #tpu.dimension_semantics<parallel>], iteration_bounds = array<i64: 1, 1>, scalar_prefetch = 0 : i64, scratch_operands = 0 : i64, tpu.core_type = #tpu.core_type<tc>, window_params = [{transform_indices = @transform_0, window_bounds = array<i64: 1>}, {transform_indices = @transform_1, window_bounds = array<i64: 1>}, {transform_indices = @transform_2, window_bounds = array<i64: 16, 128>}, {transform_indices = @transform_3, window_bounds = array<i64: 16, 128>}]} {
    %c0 = arith.constant 0 : index
    %0 = memref.load %arg2[%c0] : memref<1xf32, #tpu.memory_space<smem>>
    %c0_0 = arith.constant 0 : index
    %1 = memref.load %arg3[%c0_0] : memref<1xf32, #tpu.memory_space<smem>>
    %c0_1 = arith.constant 0 : index
    %c0_2 = arith.constant 0 : index
    %2 = vector.load %arg4[%c0_1, %c0_2] : memref<16x128xf32, #tpu.memory_space<vmem>>, vector<16x128xf32>
    %3 = vector.broadcast %0 : f32 to vector<16x128xf32>
    %4 = arith.mulf %3, %2 : vector<16x128xf32>
    %5 = vector.broadcast %1 : f32 to vector<16x128xf32>
    %6 = arith.addf %4, %5 : vector<16x128xf32>
    %c0_3 = arith.constant 0 : index
    %c0_4 = arith.constant 0 : index
    %7 = vector.load %arg5[%c0_3, %c0_4] : memref<16x128xf32, #tpu.memory_space<vmem>>, vector<16x128xf32>
    tpu.vector_store %arg5[%c0_3, %c0_4], %6 {strides = array<i32>} : memref<16x128xf32, #tpu.memory_space<vmem>>, vector<16x128xf32>,
    return
  }
  func.func @transform_0(%arg0: i32, %arg1: i32) -> i32 {
    %c0_i32 = arith.constant 0 : i32
    %c0_i32_0 = arith.constant 0 : i32
    return %c0_i32 : i32
  }
  func.func @transform_1(%arg0: i32, %arg1: i32) -> i32 {
    %c0_i32 = arith.constant 0 : i32
    %c0_i32_0 = arith.constant 0 : i32
    return %c0_i32 : i32
  }
  func.func @transform_2(%arg0: i32, %arg1: i32) -> (i32, i32) {
    %c0_i32 = arith.constant 0 : i32
    return %arg0, %arg1 : i32, i32
  }
  func.func @transform_3(%arg0: i32, %arg1: i32) -> (i32, i32) {
    %c0_i32 = arith.constant 0 : i32
    return %arg0, %arg1 : i32, i32
  }
}

</mosaic_0001>

<llo_original>
// kernel: tpu_custom_call.1
$region0: #{tpu_custom_call.1}
  #allocation0 [shape = 'u32[]', space=smem, size = 0x4, offset = 0x4, fixed_abs, tag = 'smem constant byte address 0x4 - core index']
  #allocation1 [shape = 'u32[144,128]{1,0:T(1,128)}', space=vmem, size = 0x12000, scoped, tag = 'internal scratch']
  #allocation2 [shape = 'f32[1]{0:T(128)S(6)}', space=smem, size = 0x200, scoped, tag = 'scoped memory for tpu_custom_call.1']
  #allocation3 [shape = 'f32[1]{0:T(128)S(6)}', space=smem, size = 0x200, scoped, tag = 'scoped memory for tpu_custom_call.1']
  %s0 = inlined_call_operand.<no memory space> [shape: f32[1], index: 0, kind: input, shape index: {}]
  %s1 = inlined_call_operand.<no memory space> [shape: f32[1], index: 1, kind: input, shape index: {}]
  %s2 = inlined_call_operand.hbm [shape: f32[16,128], index: 2, kind: input, shape index: {}]
  %s3 = inlined_call_operand.hbm [shape: f32[16,128], index: 3, kind: output, shape index: {}]
  %s4 = sld [smem:[#allocation0]]
  $region26: #{tpu_custom_call.1} parent=0
    _
  %s6 = ssub.s32 1, %s4
  %s7 = scalar_select 0, %s6, %s4
  %8 = sst [smem:[#allocation2]] %s0
  %9 = sst [smem:[#allocation3]] %s1
  $region1: #{tpu_custom_call.1} parent=0
    #allocation4 [shape = 'u8[8192]{0}', space=vmem, size = 0x2000, scoped, tag = 'input window, operand 2, single buffered']
    #allocation5 [shape = 's32[1]{0}', space=sflag, size = 0x4, scoped, tag = 'scoped memory for tpu_custom_call.1']
    #allocation6 [shape = 's32[1]{0}', space=sflag, size = 0x4, scoped, tag = 'scoped memory for tpu_custom_call.1']
    #allocation7 [shape = 'u8[8192]{0}', space=vmem, size = 0x2000, scoped, tag = 'output window, operand 0, single buffered']
    %10 = vsyncpa [#allocation5], 0
    %11 = vsyncpa [#allocation6], 0
    // Predicated region
    $region2: #{tpu_custom_call.1} parent=1 // pred_check
      _
    $region3: #{tpu_custom_call.1} parent=1 // pred_check_branch
      %13 = sbr.rel (0) target = $region5
    $region4: #{tpu_custom_call.1} parent=1 // pred_region
      _
    $region5: #{tpu_custom_call.1} parent=1 // pred_fallthru
      _
    // Predicated region
    $region6: #{tpu_custom_call.1} parent=1 // pred_check
      _
    $region7: #{tpu_custom_call.1} parent=1 // pred_check_branch
      %15 = sbr.rel (0) target = $region9
    $region8: #{tpu_custom_call.1} parent=1 // pred_region
      _
    $region9: #{tpu_custom_call.1} parent=1 // pred_fallthru
      _
    // Predicated region
    $region10: #{tpu_custom_call.1} parent=1 // pred_check
      _
    $region11: #{tpu_custom_call.1} parent=1 // pred_check_branch
      %17 = sbr.rel (0) target = $region13
    $region12: #{tpu_custom_call.1} parent=1 // pred_region
      %s19 = ssub.s32 256, 256
      %20 = vsyncadd [#allocation5], %s19
      %s21 = sshll.u32 [#allocation4], 4
      %s22 = int_to_ptr.vmem [resolvable:$true] %s21
      %27 = dma.hbm_to_vmem [thread:$0]  %s2, 256, %s22, [#allocation5], 128, 128, 8
    $region13: #{tpu_custom_call.1} parent=1 // pred_fallthru
      _
    // Predicated region
    $region14: #{tpu_custom_call.1} parent=1 // pred_check
      _
    $region15: #{tpu_custom_call.1} parent=1 // pred_check_branch
      %29 = sbr.rel (0) target = $region17
    $region16: #{tpu_custom_call.1} parent=1 // pred_region
      %30 = dma.done [#allocation5], 256
    $region17: #{tpu_custom_call.1} parent=1 // pred_fallthru
      _
    %s31 = sld [smem:[#allocation2]]
    %s32 = sld [smem:[#allocation3]]
    %v33 = vld [vmem:[#allocation4] sm:$0xff]
    %v34 = vld [vmem:[#allocation4 + $0x8] sm:$0xff]
    %v35 = vstv %s31
    %v36 = vmul.f32 %v35, %v33
    %v37 = vmul.f32 %v35, %v34
    %v38 = vstv %s32
    %v39 = vadd.f32 %v36, %v38
    %v40 = vadd.f32 %v37, %v38
    %41 = vst [vmem:[#allocation7] sm:$0xff] %v39
    %42 = vst [vmem:[#allocation7 + $0x8] sm:$0xff] %v40
    // Predicated region
    $region18: #{tpu_custom_call.1} parent=1 // pred_check
      _
    $region19: #{tpu_custom_call.1} parent=1 // pred_check_branch
      %44 = sbr.rel (0) target = $region21
    $region20: #{tpu_custom_call.1} parent=1 // pred_region
      %s46 = ssub.s32 256, 256
      %47 = vsyncadd [#allocation6], %s46
      %s48 = sshll.u32 [#allocation7], 4
      %s49 = int_to_ptr.vmem [resolvable:$true] %s48
      %54 = dma.vmem_to_hbm [thread:$0]  %s49, 256, %s3, [#allocation6], 128, 128, 8
    $region21: #{tpu_custom_call.1} parent=1 // pred_fallthru
      _
    // Predicated region
    $region22: #{tpu_custom_call.1} parent=1 // pred_check
      _
    $region23: #{tpu_custom_call.1} parent=1 // pred_check_branch
      %56 = sbr.rel (0) target = $region25
    $region24: #{tpu_custom_call.1} parent=1 // pred_region
      %57 = dma.done [#allocation6], 256
    $region25: #{tpu_custom_call.1} parent=1 // pred_fallthru
      _
    %58 = vsyncpa [#allocation5], 1
    %59 = vsyncpa [#allocation6], 1

</llo_original>
